<compile_context>
chip_gen: v7x
topology: tpu7x:2x2x1
jax: 0.10.0
libtpu: 0.0.40
codegen_flags: <defaults>
</compile_context>

<pallas_src>
import numpy as np
import jax
import jax.numpy as jnp
from jax.experimental import pallas as pl
from jax.experimental.pallas import tpu as pltpu


# ---------------------------------------------------------------------------
# Kernel 1: masked mean pooling (the `compress` hot path)
#   in : emb [TB, L, D] (f32)   w [TB, L, 1] (f32, mask already normalized)
#   out: cmpr [TB, D]
# ---------------------------------------------------------------------------
def _compress_kernel(emb_ref, w_ref, out_ref):
    e = emb_ref[...]                      # [TB, L, D]
    w = w_ref[...]                        # [TB, L, 1]  (lane-broadcast, no reshape)
    out_ref[...] = jnp.sum(e * w, axis=1)  # [TB, D]


def compress_pallas(emb, weights, tb=8):
    """emb: [B, L, D] f32; weights: [B, L, 1] f32 (mask / masked count)."""
    B, L, D = emb.shape
    bp = ((B + tb - 1) // tb) * tb
    if bp != B:
        emb = jnp.pad(emb, ((0, bp - B), (0, 0), (0, 0)))
        weights = jnp.pad(weights, ((0, bp - B), (0, 0), (0, 0)))
    out = pl.pallas_call(
        _compress_kernel,
        out_shape=jax.ShapeDtypeStruct((bp, D), jnp.float32),
        grid_spec=pltpu.PrefetchScalarGridSpec(
            num_scalar_prefetch=0,
            grid=(bp // tb,),
            in_specs=[
                pl.BlockSpec((tb, L, D), lambda b: (b, 0, 0)),
                pl.BlockSpec((tb, L, 1), lambda b: (b, 0, 0)),
            ],
            out_specs=pl.BlockSpec((tb, D), lambda b: (b, 0)),
        ),
        compiler_params=pltpu.CompilerParams(
            dimension_semantics=("parallel",),
            vmem_limit_bytes=64 * 1024 * 1024),
    )(emb, weights)
    return out[:B]


# ---------------------------------------------------------------------------
# Kernel 2: fused decoder (broadcast-add compressed vector + vocab projection)
#   in : dec [tm, D], cmpr [1, 1, D], W [D, tn], b [1, tn]  -> out [tm, tn]
# ---------------------------------------------------------------------------
def _decode_kernel(dec_ref, cmpr_ref, w_ref, b_ref, out_ref):
    h = dec_ref[...] + cmpr_ref[0]                       # [tm, D] + [1, D]
    acc = jnp.dot(h, w_ref[...], preferred_element_type=jnp.float32)
    out_ref[...] = (acc + b_ref[...]).astype(out_ref.dtype)


def _largest_divisor(dim, candidates):
    for c in candidates:
        if c <= dim and dim % c == 0:
            return c
    return dim


def _pick_decode_tiles(S, V, D, in_bytes):
    # tm must divide S so each M-tile lies within a single batch row (lets the
    # cmpr broadcast be fused via index_map); tn must divide V.
    tm = _largest_divisor(S, (512, 256, 128, 64, 32, 16, 8))
    tn = _largest_divisor(V, (2048, 1024, 512, 256, 128))

    def working_set(tm_, tn_):
        # double-buffered inputs + f32 output tile (budget for v7x's 64 MiB VMEM)
        return 2 * ((tm_ * D + D * tn_) * in_bytes + tn_ * 4) + 2 * tm_ * tn_ * 4

    budget = 24 * 1024 * 1024
    while (working_set(tm, tn) > budget and tn > 128
           and tn % 2 == 0 and V % (tn // 2) == 0):
        tn //= 2
    while (working_set(tm, tn) > budget and tm > 8
           and tm % 2 == 0 and S % (tm // 2) == 0):
        tm //= 2
    return tm, tn


def decode_pallas(dec_emb, cmpr, w_out, b_out, compute_dtype=jnp.float32):
    """dec_emb: [B, S, D]; cmpr: [B, 1, D] (or [B, D]); returns [B, S, V] f32."""
    B, S, D = dec_emb.shape
    V = w_out.shape[1]
    in_bytes = np.dtype(compute_dtype).itemsize
    tm, tn = _pick_decode_tiles(S, V, D, in_bytes)
    M = B * S

    dec_flat = dec_emb.reshape(M, D).astype(compute_dtype)
    cmpr3 = cmpr.reshape(B, 1, D).astype(compute_dtype)
    w_c = w_out.astype(compute_dtype)
    b_f32 = b_out.astype(jnp.float32)

    out = pl.pallas_call(
        _decode_kernel,
        out_shape=jax.ShapeDtypeStruct((M, V), jnp.float32),
        grid_spec=pltpu.PrefetchScalarGridSpec(
            num_scalar_prefetch=0,
            grid=(M // tm, V // tn),          # V innermost: dec/cmpr tiles reused
            in_specs=[
                pl.BlockSpec((tm, D), lambda mi, vi: (mi, 0)),
                pl.BlockSpec((1, 1, D), lambda mi, vi: ((mi * tm) // S, 0, 0)),
                pl.BlockSpec((D, tn), lambda mi, vi: (0, vi)),
                pl.BlockSpec((1, tn), lambda mi, vi: (0, vi)),
            ],
            out_specs=pl.BlockSpec((tm, tn), lambda mi, vi: (mi, vi)),
        ),
        compiler_params=pltpu.CompilerParams(
            dimension_semantics=("parallel", "parallel"),
            vmem_limit_bytes=64 * 1024 * 1024),
    )(dec_flat, cmpr3, w_c, b_f32)
    return out.reshape(B, S, V)


# ---------------------------------------------------------------------------
# Model wrapper (plain-JAX glue: parameters + embedding gathers + mask prep)
# ---------------------------------------------------------------------------
class SentenceAutoEncoderPallas:
    def __init__(self, vocab_size, n_embs, key, compute_dtype=jnp.float32):
        k1, k2, k3 = jax.random.split(key, 3)
        scale = 0.02
        self.embeddings = scale * jax.random.normal(
            k1, (vocab_size, n_embs), jnp.float32)
        self.w_out = scale * jax.random.normal(
            k2, (n_embs, vocab_size), jnp.float32)
        self.b_out = scale * jax.random.normal(
            k3, (1, vocab_size), jnp.float32)
        self.compute_dtype = compute_dtype

    def get_embeddings(self):
        return self.embeddings

    def compress(self, input_ids, attention_mask):
        # [B, cmp_len] -> [B, 1, n_embs]
        emb = self.embeddings[input_ids]                       # gather (glue)
        m = attention_mask.astype(jnp.float32)                 # [B, L]
        inv = 1.0 / jnp.maximum(m.sum(axis=1, keepdims=True), 1.0)
        w = (m * inv)[..., None]                               # [B, L, 1] (glue)
        cmpr = compress_pallas(emb, w)                         # [B, D]
        return cmpr[:, None, :]

    def causal_lm(self, input_ids, attention_mask, cmpr):
        dec_emb = self.embeddings[input_ids]                   # [B, S, D] gather (glue)
        del attention_mask  # padding positions still produce logits, as in HF
        return decode_pallas(dec_emb, cmpr, self.w_out, self.b_out,
                             compute_dtype=self.compute_dtype)

    def forward(self, data):
        cmpr = self.compress(data["input_ids"], data["attention_mask"])
        preds = self.causal_lm(data["output_ids"], data["output_attn_mask"], cmpr)
        return preds                                           # [B, seq_len, vocab]


# ---------------------------------------------------------------------------
# Pure-JAX reference for validation
# ---------------------------------------------------------------------------
def reference_forward(model, data):
    emb = model.embeddings[data["input_ids"]]
    m = data["attention_mask"].astype(jnp.float32)[..., None]
    cmpr = (emb * m).sum(axis=1) / jnp.maximum(m.sum(axis=1), 1.0)   # [B, D]
    dec = model.embeddings[data["output_ids"]] + cmpr[:, None, :]
    return jnp.einsum("bsd,dv->bsv", dec, model.w_out) + model.b_out[None]


if __name__ == "__main__":
    B, CMP_LEN, SEQ_LEN = 2, 8, 8
    N_EMBS, VOCAB = 128, 256    # multiples of 128 -> lane-dense tiles / MXU-aligned K

    key = jax.random.PRNGKey(0)
    k_model, k_in, k_out = jax.random.split(key, 3)

    input_ids = jax.random.randint(k_in, (B, CMP_LEN), 0, VOCAB, jnp.int32)
    output_ids = jax.random.randint(k_out, (B, SEQ_LEN), 0, VOCAB, jnp.int32)
    attention_mask = jnp.concatenate(
        [jnp.ones((B, CMP_LEN - 2), jnp.int32), jnp.zeros((B, 2), jnp.int32)], axis=1)
    output_attn_mask = jnp.ones((B, SEQ_LEN), jnp.int32)

    data = {
        "input_ids": input_ids,
        "attention_mask": attention_mask,
        "output_ids": output_ids,
        "output_attn_mask": output_attn_mask,
    }

    # f32 compute path: exact check against the pure-JAX reference.
    model = SentenceAutoEncoderPallas(VOCAB, N_EMBS, k_model,
                                      compute_dtype=jnp.float32)
    preds = jax.block_until_ready(model.forward(data))
    ref = reference_forward(model, data)
    assert preds.shape == (B, SEQ_LEN, VOCAB)
    assert jnp.allclose(preds, ref, atol=1e-5, rtol=1e-5)

    # bf16 compute path (MXU-friendly, halved weight/activation DMA): loose check.
    model_bf16 = SentenceAutoEncoderPallas(VOCAB, N_EMBS, k_model,
                                           compute_dtype=jnp.bfloat16)
    preds_bf16 = jax.block_until_ready(model_bf16.forward(data))
    assert preds_bf16.shape == (B, SEQ_LEN, VOCAB)
    assert jnp.allclose(preds_bf16, ref, atol=5e-3, rtol=5e-2)

    print("KERNEL_OK")
</pallas_src>

<mosaic_0001>
module attributes {stable_mosaic.version = 11 : i64} {
  func.func @_compress_kernel(%arg0: i32, %arg1: memref<8x8x128xf32, #tpu.memory_space<vmem>>, %arg2: memref<8x8x1xf32, #tpu.memory_space<vmem>>, %arg3: memref<8x128xf32, #tpu.memory_space<vmem>>) attributes {dimension_semantics = [#tpu.dimension_semantics<parallel>], iteration_bounds = array<i64: 1>, scalar_prefetch = 0 : i64, scratch_operands = 0 : i64, tpu.core_type = #tpu.core_type<tc>, window_params = [{transform_indices = @transform_0, window_bounds = array<i64: 8, 8, 128>}, {transform_indices = @transform_1, window_bounds = array<i64: 8, 8, 1>}, {transform_indices = @transform_2, window_bounds = array<i64: 8, 128>}]} {
    %c0 = arith.constant 0 : index
    %c0_0 = arith.constant 0 : index
    %c0_1 = arith.constant 0 : index
    %0 = vector.load %arg1[%c0, %c0_0, %c0_1] : memref<8x8x128xf32, #tpu.memory_space<vmem>>, vector<8x8x128xf32>
    %c0_2 = arith.constant 0 : index
    %c0_3 = arith.constant 0 : index
    %c0_4 = arith.constant 0 : index
    %1 = vector.load %arg2[%c0_2, %c0_3, %c0_4] : memref<8x8x1xf32, #tpu.memory_space<vmem>>, vector<8x8x1xf32>
    %2 = vector.broadcast %1 : vector<8x8x1xf32> to vector<8x8x128xf32>
    %3 = arith.mulf %0, %2 : vector<8x8x128xf32>
    %cst = arith.constant dense<0.000000e+00> : vector<8x128xf32>
    %4 = vector.multi_reduction <add>, %3, %cst [1] : vector<8x8x128xf32> to vector<8x128xf32>
    %c0_5 = arith.constant 0 : index
    %c0_6 = arith.constant 0 : index
    %5 = vector.load %arg3[%c0_5, %c0_6] : memref<8x128xf32, #tpu.memory_space<vmem>>, vector<8x128xf32>
    tpu.vector_store %arg3[%c0_5, %c0_6], %4 {strides = array<i32>} : memref<8x128xf32, #tpu.memory_space<vmem>>, vector<8x128xf32>,
    return
  }
  func.func @transform_0(%arg0: i32) -> (i32, i32, i32) {
    %c0_i32 = arith.constant 0 : i32
    %c0_i32_0 = arith.constant 0 : i32
    %c0_i32_1 = arith.constant 0 : i32
    return %arg0, %c0_i32, %c0_i32_0 : i32, i32, i32
  }
  func.func @transform_1(%arg0: i32) -> (i32, i32, i32) {
    %c0_i32 = arith.constant 0 : i32
    %c0_i32_0 = arith.constant 0 : i32
    %c0_i32_1 = arith.constant 0 : i32
    return %arg0, %c0_i32, %c0_i32_0 : i32, i32, i32
  }
  func.func @transform_2(%arg0: i32) -> (i32, i32) {
    %c0_i32 = arith.constant 0 : i32
    %c0_i32_0 = arith.constant 0 : i32
    return %arg0, %c0_i32 : i32, i32
  }
}

</mosaic_0001>

<llo_original>
// kernel: tpu_custom_call.1
$region0: #{tpu_custom_call.1}
  #allocation0 [shape = 'u32[]', space=smem, size = 0x4, offset = 0x4, fixed_abs, tag = 'smem constant byte address 0x4 - core index']
  #allocation1 [shape = 'u32[144,128]{1,0:T(1,128)}', space=vmem, size = 0x12000, scoped, tag = 'internal scratch']
  %s0 = inlined_call_operand.hbm [shape: f32[8,8,128], index: 0, kind: input, shape index: {}]
  %s1 = inlined_call_operand.hbm [shape: f32[8,8,1], index: 1, kind: input, shape index: {}]
  %s2 = inlined_call_operand.hbm [shape: f32[8,128], index: 2, kind: output, shape index: {}]
  %s3 = sld [smem:[#allocation0]]
  $region26: #{tpu_custom_call.1} parent=0
    _
  %s5 = ssub.s32 1, %s3
  %s6 = scalar_select 0, %s5, %s3
  $region1: #{tpu_custom_call.1} parent=0
    #allocation2 [shape = 'u8[32768]{0}', space=vmem, size = 0x8000, scoped, tag = 'input window, operand 0, single buffered']
    #allocation3 [shape = 's32[1]{0}', space=sflag, size = 0x4, scoped, tag = 'scoped memory for tpu_custom_call.1']
    #allocation4 [shape = 's32[1]{0}', space=sflag, size = 0x4, scoped, tag = 'scoped memory for tpu_custom_call.1']
    #allocation5 [shape = 'u8[32768]{0}', space=vmem, size = 0x8000, scoped, tag = 'input window, operand 1, single buffered']
    #allocation6 [shape = 's32[1]{0}', space=sflag, size = 0x4, scoped, tag = 'scoped memory for tpu_custom_call.1']
    #allocation7 [shape = 'u8[4096]{0}', space=vmem, size = 0x1000, scoped, tag = 'output window, operand 0, single buffered']
    %7 = vsyncpa [#allocation3], 0
    %8 = vsyncpa [#allocation6], 0
    %9 = vsyncpa [#allocation4], 0
    // Predicated region
    $region2: #{tpu_custom_call.1} parent=1 // pred_check
      _
    $region3: #{tpu_custom_call.1} parent=1 // pred_check_branch
      %11 = sbr.rel (0) target = $region5
    $region4: #{tpu_custom_call.1} parent=1 // pred_region
      %s13 = ssub.s32 1024, 1024
      %14 = vsyncadd [#allocation3], %s13
      %s15 = sshll.u32 [#allocation2], 4
      %s16 = int_to_ptr.vmem [resolvable:$true] %s15
      %21 = dma.hbm_to_vmem [thread:$0]  %s0, 1024, %s16, [#allocation3], 128, 128, 8
    $region5: #{tpu_custom_call.1} parent=1 // pred_fallthru
      _
    // Predicated region
    $region6: #{tpu_custom_call.1} parent=1 // pred_check
      _
    $region7: #{tpu_custom_call.1} parent=1 // pred_check_branch
      %23 = sbr.rel (0) target = $region9
    $region8: #{tpu_custom_call.1} parent=1 // pred_region
      %s25 = ssub.s32 1024, 1024
      %26 = vsyncadd [#allocation6], %s25
      %s27 = sshll.u32 [#allocation5], 4
      %s28 = int_to_ptr.vmem [resolvable:$true] %s27
      %33 = dma.hbm_to_vmem [thread:$0]  %s1, 1024, %s28, [#allocation6], 128, 128, 8
    $region9: #{tpu_custom_call.1} parent=1 // pred_fallthru
      _
    // Predicated region
    $region10: #{tpu_custom_call.1} parent=1 // pred_check
      _
    $region11: #{tpu_custom_call.1} parent=1 // pred_check_branch
      %35 = sbr.rel (0) target = $region13
    $region12: #{tpu_custom_call.1} parent=1 // pred_region
      %36 = dma.done [#allocation3], 1024
    $region13: #{tpu_custom_call.1} parent=1 // pred_fallthru
      _
    // Predicated region
    $region14: #{tpu_custom_call.1} parent=1 // pred_check
      _
    $region15: #{tpu_custom_call.1} parent=1 // pred_check_branch
      %38 = sbr.rel (0) target = $region17
    $region16: #{tpu_custom_call.1} parent=1 // pred_region
      %39 = dma.done [#allocation6], 1024
    $region17: #{tpu_custom_call.1} parent=1 // pred_fallthru
      _
    %v40 = vld [vmem:[#allocation2] sm:$0xff]
    %v41 = vld [vmem:[#allocation2 + $0x8] sm:$0xff]
    %v42 = vld [vmem:[#allocation2 + $0x10] sm:$0xff]
    %v43 = vld [vmem:[#allocation2 + $0x18] sm:$0xff]
    %v44 = vld [vmem:[#allocation2 + $0x20] sm:$0xff]
    %v45 = vld [vmem:[#allocation2 + $0x28] sm:$0xff]
    %v46 = vld [vmem:[#allocation2 + $0x30] sm:$0xff]
    %v47 = vld [vmem:[#allocation2 + $0x38] sm:$0xff]
    %v48 = vld [vmem:[#allocation5] sm:$0xff]
    %v49 = vld [vmem:[#allocation5 + $0x8] sm:$0xff]
    %v50 = vld [vmem:[#allocation5 + $0x10] sm:$0xff]
    %v51 = vld [vmem:[#allocation5 + $0x18] sm:$0xff]
    %v52 = vld [vmem:[#allocation5 + $0x20] sm:$0xff]
    %v53 = vld [vmem:[#allocation5 + $0x28] sm:$0xff]
    %v54 = vld [vmem:[#allocation5 + $0x30] sm:$0xff]
    %v55 = vld [vmem:[#allocation5 + $0x38] sm:$0xff]
    %57 = vset.pattern.permute.xlu0 0
    %58 = vperm.xlu0 %57, %v48
    %v59 = vpop.permute.xlu0 %58
    %62 = vset.pattern.permute.xlu0 0
    %63 = vperm.xlu0 %62, %v49
    %v64 = vpop.permute.xlu0 %63
    %67 = vset.pattern.permute.xlu0 0
    %68 = vperm.xlu0 %67, %v50
    %v69 = vpop.permute.xlu0 %68
    %72 = vset.pattern.permute.xlu0 0
    %73 = vperm.xlu0 %72, %v51
    %v74 = vpop.permute.xlu0 %73
    %77 = vset.pattern.permute.xlu0 0
    %78 = vperm.xlu0 %77, %v52
    %v79 = vpop.permute.xlu0 %78
    %82 = vset.pattern.permute.xlu0 0
    %83 = vperm.xlu0 %82, %v53
    %v84 = vpop.permute.xlu0 %83
    %87 = vset.pattern.permute.xlu0 0
    %88 = vperm.xlu0 %87, %v54
    %v89 = vpop.permute.xlu0 %88
    %92 = vset.pattern.permute.xlu0 0
    %93 = vperm.xlu0 %92, %v55
    %v94 = vpop.permute.xlu0 %93
    %v96 = vmul.f32 %v40, %v59
    %v97 = vmul.f32 %v41, %v64
    %v98 = vmul.f32 %v42, %v69
    %v99 = vmul.f32 %v43, %v74
    %v100 = vmul.f32 %v44, %v79
    %v101 = vmul.f32 %v45, %v84
    %v102 = vmul.f32 %v46, %v89
    %v103 = vmul.f32 %v47, %v94
    %v104 = vrot.slane %v96, 4
    %v105 = vadd.f32 %v96, %v104
    %v106 = vrot.slane %v105, 2
    %v107 = vadd.f32 %v105, %v106
    %v108 = vrot.slane %v107, 1
    %v109 = vadd.f32 %v107, %v108
    %v110 = vrot.slane %v97, 4
    %v111 = vadd.f32 %v97, %v110
    %v112 = vrot.slane %v111, 2
    %v113 = vadd.f32 %v111, %v112
    %v114 = vrot.slane %v113, 1
    %v115 = vadd.f32 %v113, %v114
    %v116 = vrot.slane %v98, 4
    %v117 = vadd.f32 %v98, %v116
    %v118 = vrot.slane %v117, 2
    %v119 = vadd.f32 %v117, %v118
    %v120 = vrot.slane %v119, 1
    %v121 = vadd.f32 %v119, %v120
    %v122 = vrot.slane %v99, 4
    %v123 = vadd.f32 %v99, %v122
    %v124 = vrot.slane %v123, 2
    %v125 = vadd.f32 %v123, %v124
    %v126 = vrot.slane %v125, 1
    %v127 = vadd.f32 %v125, %v126
    %v128 = vrot.slane %v100, 4
    %v129 = vadd.f32 %v100, %v128
    %v130 = vrot.slane %v129, 2
    %v131 = vadd.f32 %v129, %v130
    %v132 = vrot.slane %v131, 1
    %v133 = vadd.f32 %v131, %v132
    %v134 = vrot.slane %v101, 4
    %v135 = vadd.f32 %v101, %v134
    %v136 = vrot.slane %v135, 2
    %v137 = vadd.f32 %v135, %v136
    %v138 = vrot.slane %v137, 1
    %v139 = vadd.f32 %v137, %v138
    %v140 = vrot.slane %v102, 4
    %v141 = vadd.f32 %v102, %v140
    %v142 = vrot.slane %v141, 2
    %v143 = vadd.f32 %v141, %v142
    %v144 = vrot.slane %v143, 1
    %v145 = vadd.f32 %v143, %v144
    %v146 = vrot.slane %v103, 4
    %v147 = vadd.f32 %v103, %v146
    %v148 = vrot.slane %v147, 2
    %v149 = vadd.f32 %v147, %v148
    %v150 = vrot.slane %v149, 1
    %v151 = vadd.f32 %v149, %v150
    %vm160 = vcmask 1041409
    %v161 = vsel %vm160, %v115, %v109
    %vm162 = vcmask 1042434
    %v163 = vsel %vm162, %v121, %v161
    %vm164 = vcmask 1043459
    %v165 = vsel %vm164, %v127, %v163
    %vm166 = vcmask 1044484
    %v167 = vsel %vm166, %v133, %v165
    %vm168 = vcmask 1045509
    %v169 = vsel %vm168, %v139, %v167
    %vm170 = vcmask 1046534
    %v171 = vsel %vm170, %v145, %v169
    %vm172 = vcmask 1047559
    %v173 = vsel %vm172, %v151, %v171
    %175 = vst [vmem:[#allocation7] sm:$0xff] %v173
    // Predicated region
    $region18: #{tpu_custom_call.1} parent=1 // pred_check
      _
    $region19: #{tpu_custom_call.1} parent=1 // pred_check_branch
      %177 = sbr.rel (0) target = $region21
    $region20: #{tpu_custom_call.1} parent=1 // pred_region
      %s179 = ssub.s32 128, 128
      %180 = vsyncadd [#allocation4], %s179
      %s182 = sshll.u32 [#allocation7], 4
      %s183 = int_to_ptr.vmem [resolvable:$true] %s182
      %185 = dma.vmem_to_hbm [thread:$0]  %s183, 128, %s2, [#allocation4]
    $region21: #{tpu_custom_call.1} parent=1 // pred_fallthru
      _
    // Predicated region
    $region22: #{tpu_custom_call.1} parent=1 // pred_check
      _
    $region23: #{tpu_custom_call.1} parent=1 // pred_check_branch
      %187 = sbr.rel (0) target = $region25
    $region24: #{tpu_custom_call.1} parent=1 // pred_region
      %188 = dma.done [#allocation4], 128
    $region25: #{tpu_custom_call.1} parent=1 // pred_fallthru
      _
    %189 = vsyncpa [#allocation3], 1
    %190 = vsyncpa [#allocation6], 1
    %191 = vsyncpa [#allocation4], 1

</llo_original>
